<compile_context>
chip_gen: v5e
topology: v5e:2x2
jax: 0.10.0
libtpu: 0.0.40
codegen_flags: <defaults>
</compile_context>

<pallas_src>
import functools

import jax
import jax.numpy as jnp
from jax.experimental import pallas as pl
from jax.experimental.pallas import tpu as pltpu

# Finite "minus infinity" for the running-max init so the online-LSE
# correction term exp(m_old - m_new) never evaluates (-inf) - (-inf) = NaN.
_NEG_INIT = -1e30


def _focal_loss_kernel(logits_ref, targets_ref, out_ref,
                       m_sc, s_sc, xt_sc,
                       *, alpha, gamma, n, c, tile_n, tile_c):
    # logits_ref: (T, Ct) native dtype; targets_ref: (T, 1) int32
    i = pl.program_id(0)          # row-tile index   ("parallel")
    j = pl.program_id(1)          # class-tile index ("arbitrary", innermost)

    @pl.when(j == 0)
    def _init():
        m_sc[...] = jnp.full_like(m_sc, _NEG_INIT)
        s_sc[...] = jnp.zeros_like(s_sc)
        xt_sc[...] = jnp.zeros_like(xt_sc)

    x = logits_ref[...].astype(jnp.float32)               # (T, Ct)
    t = targets_ref[...]                                  # (T, 1)

    # Class ids covered by this block: narrow (1, Ct) iota, broadcast later.
    cls = jax.lax.broadcasted_iota(jnp.int32, (1, tile_c), 1) + j * tile_c

    if c % tile_c != 0:
        # Mask the padded columns of the final partial class block so they
        # contribute exp(-inf) = 0 and never win the running max.
        x = jnp.where(cls < c, x, -jnp.inf)

    # Online logsumexp update.
    # TODO(synk): on v6e/v7x with bf16 inputs, compute exp on bf16 z and
    # accumulate in f32 (bf16 EUP ~2x); skip on v5e (no bf16 EUP/VPU).
    m_old = m_sc[...]                                               # (T, 1)
    m_new = jnp.maximum(m_old, jnp.max(x, axis=-1, keepdims=True))  # (T, 1)
    s_sc[...] = s_sc[...] * jnp.exp(m_old - m_new) + jnp.sum(
        jnp.exp(x - m_new), axis=-1, keepdims=True)
    m_sc[...] = m_new

    # Gather the target-class logit via select (safe for -inf masked logits).
    # Out-of-range targets silently contribute 0 (unlike PyTorch, which errors).
    xt_sc[...] += jnp.sum(jnp.where(cls == t, x, 0.0), axis=-1, keepdims=True)

    @pl.when(j == pl.num_programs(1) - 1)
    def _finalize():
        # ce = logsumexp(x) - x_t = log(s) + m - x_t
        ce = jnp.log(s_sc[...]) + m_sc[...] - xt_sc[...]            # (T, 1)
        ce = jnp.maximum(ce, 0.0)     # guard 1-ulp negatives -> pt <= 1
        pt = jnp.exp(-ce)
        focal = alpha * (1.0 - pt) ** gamma * ce                    # (T, 1)

        # Mask padded rows of the final (partial) row tile.
        row = jax.lax.broadcasted_iota(jnp.int32, focal.shape, 0) + i * tile_n
        focal = jnp.where(row < n, focal, 0.0)

        # One tiny store per row tile (not per class step).
        out_ref[...] = jnp.sum(focal).reshape(1, 1, 1)


def _choose_tiles(n, c, itemsize):
    """Pick (tile_n, tile_c) against a ~6 MiB logits-block budget."""
    # dtype-aware sublane alignment: f32 -> 8, bf16 -> 16, 8-bit -> 32 rows
    align = max(8, 32 // max(1, itemsize))
    target_bytes = 6 << 20
    row_bytes = c * itemsize

    if align * row_bytes <= target_bytes:
        # Full class row fits in the budget: no class tiling.
        tile_c = c
        tile_n = max(align, (target_bytes // row_bytes) // align * align)
    else:
        # Vocab-scale C: tile the class axis in multiples of 128 lanes and
        # keep the row tile at the alignment minimum.
        tile_n = align
        tile_c = max(128, (target_bytes // (align * itemsize)) // 128 * 128)
        tile_c = min(tile_c, pl.cdiv(c, 128) * 128)

    # Keep >= 2 row tiles whenever N allows, so the "parallel" grid axis can
    # feed both v7x TensorCores instead of collapsing to a single step.
    if n >= 2 * align:
        tile_n = min(tile_n, ((n - 1) // align) * align)
    else:
        tile_n = min(tile_n, n)   # tile == full N (may be unaligned; allowed)
    return tile_n, tile_c


def focal_loss(logits, targets, alpha=1.0, gamma=2, *, block_n=None, block_c=None):
    """logits: (N, C) float (any dtype; prefer bf16 to halve HBM traffic),
    targets: (N,) int class indices. Returns scalar f32 mean focal loss."""
    N, C = logits.shape
    targets_2d = targets.reshape(N, 1).astype(jnp.int32)

    tile_n, tile_c = _choose_tiles(N, C, logits.dtype.itemsize)
    if block_n is not None:
        tile_n = block_n
    if block_c is not None:
        tile_c = block_c

    num_row_tiles = pl.cdiv(N, tile_n)
    num_cls_tiles = pl.cdiv(C, tile_c)

    # Integer-valued gamma keeps the integer_pow lowering (and the ce clamp in
    # the kernel makes non-integer gamma NaN-free as well).
    g = float(gamma)
    gamma_static = int(g) if g.is_integer() else g

    kernel = functools.partial(
        _focal_loss_kernel,
        alpha=float(alpha),
        gamma=gamma_static,
        n=N,
        c=C,
        tile_n=tile_n,
        tile_c=tile_c,
    )

    block_bytes = tile_n * tile_c * logits.dtype.itemsize
    vmem_limit = int(min(56 << 20, 2 * block_bytes + (16 << 20)))

    partials = pl.pallas_call(
        kernel,
        out_shape=jax.ShapeDtypeStruct((num_row_tiles, 1, 1), jnp.float32),
        grid=(num_row_tiles, num_cls_tiles),
        in_specs=[
            pl.BlockSpec((tile_n, tile_c), lambda i, j: (i, j)),  # logits tile
            pl.BlockSpec((tile_n, 1), lambda i, j: (i, 0)),       # targets tile
        ],
        out_specs=pl.BlockSpec((1, 1, 1), lambda i, j: (i, 0, 0)),
        scratch_shapes=[
            pltpu.VMEM((tile_n, 1), jnp.float32),   # running max m
            pltpu.VMEM((tile_n, 1), jnp.float32),   # running sum exp(x - m)
            pltpu.VMEM((tile_n, 1), jnp.float32),   # gathered target logit
        ],
        compiler_params=pltpu.CompilerParams(
            dimension_semantics=("parallel", "arbitrary"),
            vmem_limit_bytes=vmem_limit,
        ),
    )(logits, targets_2d)

    # Tiny final reduction + mean in the wrapper (keeps the row axis parallel).
    return jnp.sum(partials) / N


def _focal_loss_ref(logits, targets, alpha=1.0, gamma=2):
    # pure-JAX reference for validation
    x = logits.astype(jnp.float32)
    lse = jax.nn.logsumexp(x, axis=-1)
    x_t = jnp.take_along_axis(x, targets[:, None].astype(jnp.int32), axis=-1)[:, 0]
    ce = lse - x_t
    pt = jnp.exp(-ce)
    return jnp.mean(alpha * (1.0 - pt) ** gamma * ce)


if __name__ == "__main__":
    key = jax.random.PRNGKey(0)
    k1, k2, k3, k4 = jax.random.split(key, 4)

    # Case 1: small f32 problem, auto tiling -> single-block path (grid (1, 1)).
    N, C = 8, 32
    logits = jax.random.normal(k1, (N, C), dtype=jnp.float32)
    targets = jax.random.randint(k2, (N,), 0, C, dtype=jnp.int32)
    out = jax.block_until_ready(focal_loss(logits, targets, alpha=1.0, gamma=2))
    ref = jax.block_until_ready(_focal_loss_ref(logits, targets, alpha=1.0, gamma=2))
    assert jnp.allclose(out, ref, atol=1e-5, rtol=1e-5), (out, ref)

    # Case 2: bf16 logits with forced small tiles to exercise the class-tiled
    # online-logsumexp path (grid (3, 3)) including partial row & class blocks.
    N2, C2 = 20, 320
    logits2 = jax.random.normal(k3, (N2, C2), dtype=jnp.bfloat16)
    targets2 = jax.random.randint(k4, (N2,), 0, C2, dtype=jnp.int32)
    out2 = jax.block_until_ready(
        focal_loss(logits2, targets2, alpha=0.5, gamma=2, block_n=8, block_c=128))
    ref2 = jax.block_until_ready(_focal_loss_ref(logits2, targets2, alpha=0.5, gamma=2))
    assert jnp.allclose(out2, ref2, atol=1e-4, rtol=1e-4), (out2, ref2)

    print("KERNEL_OK")
</pallas_src>

<mosaic_0001>
module attributes {stable_mosaic.version = 11 : i64} {
  func.func @_focal_loss_kernel(%arg0: i32, %arg1: i32, %arg2: memref<8x32xf32, #tpu.memory_space<vmem>>, %arg3: memref<8x1xi32, #tpu.memory_space<vmem>>, %arg4: memref<1x1x1xf32, #tpu.memory_space<vmem>>, %arg5: memref<8x1xf32, #tpu.memory_space<vmem>>, %arg6: memref<8x1xf32, #tpu.memory_space<vmem>>, %arg7: memref<8x1xf32, #tpu.memory_space<vmem>>) attributes {dimension_semantics = [#tpu.dimension_semantics<parallel>, #tpu.dimension_semantics<arbitrary>], iteration_bounds = array<i64: 1, 1>, scalar_prefetch = 0 : i64, scratch_operands = 3 : i64, tpu.core_type = #tpu.core_type<tc>, window_params = [{transform_indices = @transform_0, window_bounds = array<i64: 8, 32>}, {transform_indices = @transform_1, window_bounds = array<i64: 8, 1>}, {transform_indices = @transform_2, window_bounds = array<i64: 1, 1, 1>}]} {
    %c0_i32 = arith.constant 0 : i32
    %0 = arith.cmpi eq, %arg1, %c0_i32 : i32
    %1 = arith.extui %0 : i1 to i32
    %c0_i32_0 = arith.constant 0 : i32
    %2 = arith.cmpi ne, %1, %c0_i32_0 : i32
    scf.if %2 {
      %cst_21 = arith.constant -1.000000e+30 : f32
      %38 = vector.broadcast %cst_21 : f32 to vector<8x1xf32>
      %c0_22 = arith.constant 0 : index
      %c0_23 = arith.constant 0 : index
      %39 = vector.load %arg5[%c0_22, %c0_23] : memref<8x1xf32, #tpu.memory_space<vmem>>, vector<8x1xf32>
      tpu.vector_store %arg5[%c0_22, %c0_23], %38 {strides = array<i32>} : memref<8x1xf32, #tpu.memory_space<vmem>>, vector<8x1xf32>,
      %cst_24 = arith.constant 0.000000e+00 : f32
      %40 = vector.broadcast %cst_24 : f32 to vector<8x1xf32>
      %c0_25 = arith.constant 0 : index
      %c0_26 = arith.constant 0 : index
      %41 = vector.load %arg6[%c0_25, %c0_26] : memref<8x1xf32, #tpu.memory_space<vmem>>, vector<8x1xf32>
      tpu.vector_store %arg6[%c0_25, %c0_26], %40 {strides = array<i32>} : memref<8x1xf32, #tpu.memory_space<vmem>>, vector<8x1xf32>,
      %cst_27 = arith.constant 0.000000e+00 : f32
      %42 = vector.broadcast %cst_27 : f32 to vector<8x1xf32>
      %c0_28 = arith.constant 0 : index
      %c0_29 = arith.constant 0 : index
      %43 = vector.load %arg7[%c0_28, %c0_29] : memref<8x1xf32, #tpu.memory_space<vmem>>, vector<8x1xf32>
      tpu.vector_store %arg7[%c0_28, %c0_29], %42 {strides = array<i32>} : memref<8x1xf32, #tpu.memory_space<vmem>>, vector<8x1xf32>,
    } else {
    }
    %c0 = arith.constant 0 : index
    %c0_1 = arith.constant 0 : index
    %3 = vector.load %arg2[%c0, %c0_1] : memref<8x32xf32, #tpu.memory_space<vmem>>, vector<8x32xf32>
    %c0_2 = arith.constant 0 : index
    %c0_3 = arith.constant 0 : index
    %4 = vector.load %arg3[%c0_2, %c0_3] : memref<8x1xi32, #tpu.memory_space<vmem>>, vector<8x1xi32>
    %5 = tpu.iota {dimensions = array<i32: 1>} : vector<1x32xi32>
    %c32_i32 = arith.constant 32 : i32
    %6 = arith.muli %arg1, %c32_i32 : i32
    %7 = vector.broadcast %6 : i32 to vector<1x32xi32>
    %8 = arith.addi %5, %7 : vector<1x32xi32>
    %c0_4 = arith.constant 0 : index
    %c0_5 = arith.constant 0 : index
    %9 = vector.load %arg5[%c0_4, %c0_5] : memref<8x1xf32, #tpu.memory_space<vmem>>, vector<8x1xf32>
    %cst = arith.constant dense<0xFF800000> : vector<8xf32>
    %10 = vector.multi_reduction <maximumf>, %3, %cst [1] : vector<8x32xf32> to vector<8xf32>
    %11 = vector.shape_cast %10 : vector<8xf32> to vector<8x1xf32>
    %12 = arith.maximumf %9, %11 : vector<8x1xf32>
    %c0_6 = arith.constant 0 : index
    %c0_7 = arith.constant 0 : index
    %13 = vector.load %arg6[%c0_6, %c0_7] : memref<8x1xf32, #tpu.memory_space<vmem>>, vector<8x1xf32>
    %14 = arith.subf %9, %12 : vector<8x1xf32>
    %15 = math.exp %14 : vector<8x1xf32>
    %16 = arith.mulf %13, %15 : vector<8x1xf32>
    %17 = vector.broadcast %12 : vector<8x1xf32> to vector<8x32xf32>
    %18 = arith.subf %3, %17 : vector<8x32xf32>
    %19 = math.exp %18 : vector<8x32xf32>
    %cst_8 = arith.constant dense<0.000000e+00> : vector<8xf32>
    %20 = vector.multi_reduction <add>, %19, %cst_8 [1] : vector<8x32xf32> to vector<8xf32>
    %21 = vector.shape_cast %20 : vector<8xf32> to vector<8x1xf32>
    %22 = arith.addf %16, %21 : vector<8x1xf32>
    %c0_9 = arith.constant 0 : index
    %c0_10 = arith.constant 0 : index
    %23 = vector.load %arg6[%c0_9, %c0_10] : memref<8x1xf32, #tpu.memory_space<vmem>>, vector<8x1xf32>
    tpu.vector_store %arg6[%c0_9, %c0_10], %22 {strides = array<i32>} : memref<8x1xf32, #tpu.memory_space<vmem>>, vector<8x1xf32>,
    %c0_11 = arith.constant 0 : index
    %c0_12 = arith.constant 0 : index
    %24 = vector.load %arg5[%c0_11, %c0_12] : memref<8x1xf32, #tpu.memory_space<vmem>>, vector<8x1xf32>
    tpu.vector_store %arg5[%c0_11, %c0_12], %12 {strides = array<i32>} : memref<8x1xf32, #tpu.memory_space<vmem>>, vector<8x1xf32>,
    %c0_13 = arith.constant 0 : index
    %c0_14 = arith.constant 0 : index
    %25 = vector.load %arg7[%c0_13, %c0_14] : memref<8x1xf32, #tpu.memory_space<vmem>>, vector<8x1xf32>
    %26 = vector.broadcast %8 : vector<1x32xi32> to vector<8x32xi32>
    %27 = vector.broadcast %4 : vector<8x1xi32> to vector<8x32xi32>
    %28 = arith.cmpi eq, %26, %27 : vector<8x32xi32>
    %cst_15 = arith.constant 0.000000e+00 : f32
    %29 = vector.broadcast %cst_15 : f32 to vector<8x32xf32>
    %30 = arith.select %28, %3, %29 : vector<8x32xi1>, vector<8x32xf32>
    %cst_16 = arith.constant dense<0.000000e+00> : vector<8xf32>
    %31 = vector.multi_reduction <add>, %30, %cst_16 [1] : vector<8x32xf32> to vector<8xf32>
    %32 = vector.shape_cast %31 : vector<8xf32> to vector<8x1xf32>
    %33 = arith.addf %25, %32 : vector<8x1xf32>
    %c0_17 = arith.constant 0 : index
    %c0_18 = arith.constant 0 : index
    %34 = vector.load %arg7[%c0_17, %c0_18] : memref<8x1xf32, #tpu.memory_space<vmem>>, vector<8x1xf32>
    tpu.vector_store %arg7[%c0_17, %c0_18], %33 {strides = array<i32>} : memref<8x1xf32, #tpu.memory_space<vmem>>, vector<8x1xf32>,
    %c0_i32_19 = arith.constant 0 : i32
    %35 = arith.cmpi eq, %arg1, %c0_i32_19 : i32
    %36 = arith.extui %35 : i1 to i32
    %c0_i32_20 = arith.constant 0 : i32
    %37 = arith.cmpi ne, %36, %c0_i32_20 : i32
    scf.if %37 {
      %c0_21 = arith.constant 0 : index
      %c0_22 = arith.constant 0 : index
      %38 = vector.load %arg6[%c0_21, %c0_22] : memref<8x1xf32, #tpu.memory_space<vmem>>, vector<8x1xf32>
      %39 = math.log %38 : vector<8x1xf32>
      %c0_23 = arith.constant 0 : index
      %c0_24 = arith.constant 0 : index
      %40 = vector.load %arg5[%c0_23, %c0_24] : memref<8x1xf32, #tpu.memory_space<vmem>>, vector<8x1xf32>
      %41 = arith.addf %39, %40 : vector<8x1xf32>
      %c0_25 = arith.constant 0 : index
      %c0_26 = arith.constant 0 : index
      %42 = vector.load %arg7[%c0_25, %c0_26] : memref<8x1xf32, #tpu.memory_space<vmem>>, vector<8x1xf32>
      %43 = arith.subf %41, %42 : vector<8x1xf32>
      %cst_27 = arith.constant 0.000000e+00 : f32
      %44 = vector.broadcast %cst_27 : f32 to vector<8x1xf32>
      %45 = arith.maximumf %43, %44 : vector<8x1xf32>
      %cst_28 = arith.constant 0.000000e+00 : f32
      %46 = vector.broadcast %cst_28 : f32 to vector<8x1xf32>
      %47 = arith.subf %46, %45 : vector<8x1xf32>
      %48 = math.exp %47 : vector<8x1xf32>
      %cst_29 = arith.constant 1.000000e+00 : f32
      %49 = vector.broadcast %cst_29 : f32 to vector<8x1xf32>
      %50 = arith.subf %49, %48 : vector<8x1xf32>
      %51 = arith.mulf %50, %50 : vector<8x1xf32>
      %cst_30 = arith.constant 1.000000e+00 : f32
      %52 = vector.broadcast %cst_30 : f32 to vector<8x1xf32>
      %53 = arith.mulf %52, %51 : vector<8x1xf32>
      %54 = arith.mulf %53, %45 : vector<8x1xf32>
      %55 = tpu.iota {dimensions = array<i32: 0>} : vector<8x1xi32>
      %c8_i32 = arith.constant 8 : i32
      %56 = arith.muli %arg0, %c8_i32 : i32
      %57 = vector.broadcast %56 : i32 to vector<8x1xi32>
      %58 = arith.addi %55, %57 : vector<8x1xi32>
      %c8_i32_31 = arith.constant 8 : i32
      %59 = vector.broadcast %c8_i32_31 : i32 to vector<8x1xi32>
      %60 = arith.cmpi slt, %58, %59 : vector<8x1xi32>
      %cst_32 = arith.constant 0.000000e+00 : f32
      %61 = vector.broadcast %cst_32 : f32 to vector<8x1xf32>
      %62 = arith.select %60, %54, %61 : vector<8x1xi1>, vector<8x1xf32>
      %63 = vector.shape_cast %62 : vector<8x1xf32> to vector<1x8x1xf32>
      %cst_33 = arith.constant dense<0.000000e+00> : vector<1xf32>
      %64 = vector.multi_reduction <add>, %63, %cst_33 [1, 2] : vector<1x8x1xf32> to vector<1xf32>
      %65 = vector.shape_cast %64 : vector<1xf32> to vector<1x1x1xf32>
      %66 = vector.extract %65[0, 0, 0] : f32 from vector<1x1x1xf32>
      %67 = vector.broadcast %66 : f32 to vector<1x1x1xf32>
      %c0_34 = arith.constant 0 : index
      %c0_35 = arith.constant 0 : index
      %c0_36 = arith.constant 0 : index
      %68 = vector.load %arg4[%c0_34, %c0_35, %c0_36] : memref<1x1x1xf32, #tpu.memory_space<vmem>>, vector<1x1x1xf32>
      tpu.vector_store %arg4[%c0_34, %c0_35, %c0_36], %67 {strides = array<i32>} : memref<1x1x1xf32, #tpu.memory_space<vmem>>, vector<1x1x1xf32>,
    } else {
    }
    return
  }
  func.func @transform_0(%arg0: i32, %arg1: i32) -> (i32, i32) {
    %c0_i32 = arith.constant 0 : i32
    return %arg0, %arg1 : i32, i32
  }
  func.func @transform_1(%arg0: i32, %arg1: i32) -> (i32, i32) {
    %c0_i32 = arith.constant 0 : i32
    %c0_i32_0 = arith.constant 0 : i32
    return %arg0, %c0_i32 : i32, i32
  }
  func.func @transform_2(%arg0: i32, %arg1: i32) -> (i32, i32, i32) {
    %c0_i32 = arith.constant 0 : i32
    %c0_i32_0 = arith.constant 0 : i32
    %c0_i32_1 = arith.constant 0 : i32
    return %arg0, %c0_i32, %c0_i32_0 : i32, i32, i32
  }
}

</mosaic_0001>

<llo_original>
// kernel: tpu_custom_call.1
$region0: #{tpu_custom_call.1}
  #allocation0 [shape = 'u32[]', space=smem, size = 0x4, offset = 0x4, fixed_abs, tag = 'smem constant byte address 0x4 - core index']
  #allocation1 [shape = 'u32[72,128]{1,0:T(1,128)}', space=vmem, size = 0x9000, scoped, tag = 'internal scratch']
  #allocation2 [shape = 'f32[8,1]{1,0:T(8,128)}', space=vmem, size = 0x1000, scoped, tag = 'scratch operand']
  #allocation3 [shape = 'f32[8,1]{1,0:T(8,128)}', space=vmem, size = 0x1000, scoped, tag = 'scratch operand']
  #allocation4 [shape = 'f32[8,1]{1,0:T(8,128)}', space=vmem, size = 0x1000, scoped, tag = 'scratch operand']
  %s0 = inlined_call_operand.vmem [shape: f32[8,32], index: 0, kind: input, shape index: {}]
  %s1 = inlined_call_operand.vmem [shape: s32[8,1], index: 1, kind: input, shape index: {}]
  %s2 = inlined_call_operand.hbm [shape: f32[1,1,1], index: 2, kind: output, shape index: {}]
  %s3 = sld [smem:[#allocation0]]
  $region26: #{tpu_custom_call.1} parent=0
    _
  %s5 = ssub.s32 1, %s3
  %s6 = scalar_select 0, %s5, %s3
  $region1: #{tpu_custom_call.1} parent=0
    #allocation5 [shape = 'u8[512]{0}', space=vmem, size = 0x400, scoped, tag = 'output window, operand 0, single buffered']
    #allocation6 [shape = 's32[1]{0}', space=sflag, size = 0x4, scoped, tag = 'scoped memory for tpu_custom_call.1']
    %7 = vsyncpa [#allocation6], 0
    // Predicated region
    $region2: #{tpu_custom_call.1} parent=1 // pred_check
      _
    $region3: #{tpu_custom_call.1} parent=1 // pred_check_branch
      %9 = sbr.rel (0) target = $region5
    $region4: #{tpu_custom_call.1} parent=1 // pred_region
      _
    $region5: #{tpu_custom_call.1} parent=1 // pred_fallthru
      _
    // Predicated region
    $region6: #{tpu_custom_call.1} parent=1 // pred_check
      _
    $region7: #{tpu_custom_call.1} parent=1 // pred_check_branch
      %11 = sbr.rel (0) target = $region9
    $region8: #{tpu_custom_call.1} parent=1 // pred_region
      _
    $region9: #{tpu_custom_call.1} parent=1 // pred_fallthru
      _
    %p12 = scmp.eq.s32.totalorder 0, 0
    // Predicated region
    $region10: #{tpu_custom_call.1} parent=1 // pred_check
      %p13 = pneg %p12
    $region11: #{tpu_custom_call.1} parent=1 // pred_check_branch
      %15 = sbr.rel (%p13) target = $region13
    $region12: #{tpu_custom_call.1} parent=1 // pred_region
      %vm16 = vcmask 7168
      %17 = vst.msk [vmem:[#allocation2] sm:$0xff] %vm16, -1e+30
      %18 = vst.msk [vmem:[#allocation3] sm:$0xff] %vm16, 0.0
      %19 = vst.msk [vmem:[#allocation4] sm:$0xff] %vm16, 0.0
    $region13: #{tpu_custom_call.1} parent=1 // pred_fallthru
      _
    %v20 = vld [vmem:[%s0] sm:$0xff]
    %v21 = vld [vmem:[%s1] sm:$0xff]
    %v22 = vlaneseq
    %v23 = vand.u32 %v22, 127
    %s24 = smul.u32 0, 32
    %v25 = vstv %s24
    %v26 = vadd.s32 %v23, %v25
    %v27 = vld [vmem:[#allocation2] sm:$0xff]
    %vm28 = vcmask 261120
    %v29 = vsel %vm28, %v20, -inf
    %30 = vmax.xlane.f32.xlu0 %v29
    %v31 = vpop.xlane.xlu0 %30
    %v32 = vmax.f32 %v27, %v31
    %v33 = vld [vmem:[#allocation3] sm:$0xff]
    %v34 = vsub.f32 %v27, %v32
    %v35 = vmul.f32 %v34, 1.442695
    %v36 = vpow.pop %v35
    %v37 = vmul.f32 %v33, %v36
    %39 = vset.pattern.permute.xlu0 0
    %40 = vperm.xlu0 %39, %v32
    %v41 = vpop.permute.xlu0 %40
    %v43 = vsub.f32 %v20, %v41
    %v44 = vmul.f32 %v43, 1.442695
    %v45 = vpow.pop %v44
    %v46 = vsel %vm28, %v45, 0.0
    %47 = vadd.xlane.f32.xlu0 %v46
    %v48 = vpop.xlane.xlu0 %47
    %v49 = vadd.f32 %v37, %v48
    %vm50 = vcmask 7168
    %51 = vst.msk [vmem:[#allocation3] sm:$0xff] %vm50, %v49
    %52 = vst.msk [vmem:[#allocation2] sm:$0xff] %vm50, %v32
    %v53 = vld [vmem:[#allocation4] sm:$0xff]
    %54 = vset.pattern.permute.xlu0 0
    %55 = vperm.xlu0 %54, %v21
    %v56 = vpop.permute.xlu0 %55
    %vm57 = vcmp.eq.s32.totalorder %v26, %v56
    %v58 = vsel %vm57, %v20, 0.0
    %v59 = vsel %vm28, %v58, 0.0
    %60 = vadd.xlane.f32.xlu0 %v59
    %v61 = vpop.xlane.xlu0 %60
    %v62 = vadd.f32 %v53, %v61
    %63 = vst.msk [vmem:[#allocation4] sm:$0xff] %vm50, %v62
    // Predicated region
    $region14: #{tpu_custom_call.1} parent=1 // pred_check
      %p64 = pneg %p12
    $region15: #{tpu_custom_call.1} parent=1 // pred_check_branch
      %66 = sbr.rel (%p64) target = $region17
    $region16: #{tpu_custom_call.1} parent=1 // pred_region
      %v67 = vld [vmem:[#allocation3] sm:$0xff]
      %v68 = vlog2.pop %v67
      %v69 = vmul.f32 %v68, 0.6931472
      %v70 = vld [vmem:[#allocation2] sm:$0xff]
      %v71 = vadd.f32 %v69, %v70
      %v72 = vld [vmem:[#allocation4] sm:$0xff]
      %v73 = vsub.f32 %v71, %v72
      %v74 = vmax.f32 %v73, 0.0
      %v75 = vsub.f32 0.0, %v74
      %v76 = vmul.f32 %v75, 1.442695
      %v77 = vpow.pop %v76
      %v78 = vsub.f32 1.0, %v77
      %v79 = vmul.f32 %v78, %v78
      %v80 = vmul.f32 %v79, %v74
      %v81 = vlaneseq
      %v82 = vshrl.u32 %v81, 7
      %s83 = smul.u32 0, 8
      %v84 = vstv %s83
      %v85 = vadd.s32 %v82, %v84
      %vm86 = vcmp.lt.s32.totalorder %v85, 8
      %v87 = vsel %vm86, %v80, 0.0
      %v88 = vsel %vm50, %v87, 0.0
      %89 = vadd.xlane.f32.xlu0 %v88
      %v90 = vpop.xlane.xlu0 %89
      %v91 = vrot.slane %v90, 4
      %v92 = vadd.f32 %v90, %v91
      %v93 = vrot.slane %v92, 2
      %v94 = vadd.f32 %v92, %v93
      %v95 = vrot.slane %v94, 1
      %v96 = vadd.f32 %v94, %v95
      %s97 = vtos %v96
      %v98 = vstv %s97
      %vm99 = vcmask 0
      %100 = vst.msk [vmem:[#allocation5] sm:$0x1] %vm99, %v98
    $region17: #{tpu_custom_call.1} parent=1 // pred_fallthru
      _
    // Predicated region
    $region18: #{tpu_custom_call.1} parent=1 // pred_check
      _
    $region19: #{tpu_custom_call.1} parent=1 // pred_check_branch
      %102 = sbr.rel (0) target = $region21
    $region20: #{tpu_custom_call.1} parent=1 // pred_region
      %104 = vsyncadd [#allocation6], 0
      %s106 = sshll.u32 [#allocation5], 4
      %s107 = int_to_ptr.vmem [resolvable:$true] %s106
      %s108 = sshll.u32 %s2, 4
      %s109 = int_to_ptr.hbm [resolvable:$true] %s108
      %111 = dma.vmem_to_hbm [thread:$0]  %s107, 16, %s109, [#allocation6]
    $region21: #{tpu_custom_call.1} parent=1 // pred_fallthru
      _
    // Predicated region
    $region22: #{tpu_custom_call.1} parent=1 // pred_check
      _
    $region23: #{tpu_custom_call.1} parent=1 // pred_check_branch
      %113 = sbr.rel (0) target = $region25
    $region24: #{tpu_custom_call.1} parent=1 // pred_region
      %115 = dma.done [#allocation6], 16
    $region25: #{tpu_custom_call.1} parent=1 // pred_fallthru
      _
    %116 = vsyncpa [#allocation6], 1

</llo_original>
